<compile_context>
chip_gen: v7x
topology: tpu7x:2x2x1
jax: 0.10.0
libtpu: 0.0.40
codegen_flags: <defaults>
</compile_context>

<pallas_src>
import functools

import jax
import jax.numpy as jnp
from jax import lax
from jax.experimental import pallas as pl
from jax.experimental.pallas import tpu as pltpu


def _combined_mlp_kernel(x_ref, w1_ref, b1_ref, w2_ref, b2_ref, o_ref,
                         *, n_models, h_dim, d_out):
    """All N sub-models fused into two MXU matmuls on compact weights.

    x_ref  : (N, D_in)
    w1_ref : (D_in, N*H)     column block i == model i's first-layer weight
    b1_ref : (1,  N*H)
    w2_ref : (H,  N*D_out)   column block i == model i's second-layer weight
    b2_ref : (1,  N*D_out)
    o_ref  : (1,  N*D_out)
    """
    x = x_ref[...]                                            # (N, D_in)

    # ---- Layer 1: one cross-product matmul; only diagonal blocks are kept.
    # h_full[i, j*H + k] = x[i] . w1[j][:, k]
    h_full = jnp.dot(x, w1_ref[...], preferred_element_type=jnp.float32)
    h_full = jnp.maximum(h_full + b1_ref[...], 0.0)           # bias + ReLU (VPU)

    # Diagonal-block select -> (N, H).  N is tiny; static slices, unrolled.
    h_parts = [h_full[i:i + 1, i * h_dim:(i + 1) * h_dim]
               for i in range(n_models)]
    h = jnp.concatenate(h_parts, axis=0)                      # (N, H), f32

    # ---- Layer 2: one cross-product matmul; keep block i of row i.
    y_full = jnp.dot(h, w2_ref[...], preferred_element_type=jnp.float32)
    y_full = y_full + b2_ref[...]                             # (N, N*D_out)

    # out[0, c] = y_full[c // D_out, c]  via lane mask + sublane reduce,
    # producing the lane-dense (1, N*D_out) result directly (single vst).
    shape = (n_models, n_models * d_out)
    col = lax.broadcasted_iota(jnp.int32, shape, 1)
    row = lax.broadcasted_iota(jnp.int32, shape, 0)
    lo = row * d_out
    mask = (col >= lo) & (col < lo + d_out)
    out = jnp.sum(jnp.where(mask, y_full, 0.0), axis=0, keepdims=True)
    o_ref[...] = out.astype(o_ref.dtype)                      # (1, N*D_out)


@jax.jit
def combined_model_forward(x, w1, b1, w2, b2):
    """
    x  : (N, D_in)      float32   (row i is the input to sub-model i)
    w1 : (N, D_in, H)   float32
    b1 : (N, 1, H)      float32
    w2 : (N, H, D_out)  float32
    b2 : (N, 1, D_out)  float32
    returns: (1, N * D_out) float32   (== torch.cat(outputs, dim=1))
    """
    n_models, d_in = x.shape
    h_dim = w1.shape[2]
    d_out = w2.shape[2]

    # Cheap layout prep: column-concatenate per-model weights.  Same byte
    # count as the raw weights (no block-diagonal zero padding in HBM).
    w1_cat = jnp.transpose(w1, (1, 0, 2)).reshape(d_in, n_models * h_dim)
    w2_cat = jnp.transpose(w2, (1, 0, 2)).reshape(h_dim, n_models * d_out)
    b1_cat = b1.reshape(1, n_models * h_dim)
    b2_cat = b2.reshape(1, n_models * d_out)

    kernel = functools.partial(_combined_mlp_kernel,
                               n_models=n_models, h_dim=h_dim, d_out=d_out)
    vmem = pl.BlockSpec(memory_space=pltpu.MemorySpace.VMEM)
    return pl.pallas_call(
        kernel,
        out_shape=jax.ShapeDtypeStruct((1, n_models * d_out), jnp.float32),
        in_specs=[vmem] * 5,          # whole arrays resident in VMEM, no grid
        out_specs=vmem,
    )(x, w1_cat, b1_cat, w2_cat, b2_cat)


def _init_params(key, n_models, d_in, h_dim, d_out):
    """Deterministic per-model parameter init (synthetic; no checkpoint load)."""
    k1, k2, k3, k4 = jax.random.split(key, 4)
    w1 = jax.random.normal(k1, (n_models, d_in, h_dim), jnp.float32) * 0.1
    b1 = jax.random.normal(k2, (n_models, 1, h_dim), jnp.float32) * 0.01
    w2 = jax.random.normal(k3, (n_models, h_dim, d_out), jnp.float32) * 0.1
    b2 = jax.random.normal(k4, (n_models, 1, d_out), jnp.float32) * 0.01
    return w1, b1, w2, b2


def _reference(x, w1, b1, w2, b2):
    """Pure-JAX per-model reference of the same forward pass."""
    xb = x[:, None, :]                                        # (N, 1, D_in)
    h = jnp.maximum(jnp.einsum("nbi,nih->nbh", xb, w1) + b1, 0.0)
    y = jnp.einsum("nbh,nho->nbo", h, w2) + b2                # (N, 1, D_out)
    n, _, d_out = y.shape
    return y.reshape(1, n * d_out)                            # torch.cat(dim=1)


if __name__ == "__main__":
    # One sub-model per leading row of x (idx < x.size(0) in the torch code).
    N_MODELS = 4
    D_IN = 32
    H_DIM = 64
    D_OUT = 32

    key = jax.random.PRNGKey(0)
    kx, kp = jax.random.split(key)
    x = jax.random.normal(kx, (N_MODELS, D_IN), jnp.float32)
    w1, b1, w2, b2 = _init_params(kp, N_MODELS, D_IN, H_DIM, D_OUT)

    out = combined_model_forward(x, w1, b1, w2, b2)
    out = jax.block_until_ready(out)

    ref = _reference(x, w1, b1, w2, b2)
    assert out.shape == (1, N_MODELS * D_OUT), out.shape
    assert jnp.allclose(out, ref, atol=1e-5, rtol=1e-5), "mismatch vs reference"

    print("KERNEL_OK")
</pallas_src>

<mosaic_0001>
module attributes {stable_mosaic.version = 11 : i64} {
  func.func @_combined_mlp_kernel(%arg0: memref<4x32xf32, #tpu.memory_space<vmem>>, %arg1: memref<32x256xf32, #tpu.memory_space<vmem>>, %arg2: memref<1x256xf32, #tpu.memory_space<vmem>>, %arg3: memref<64x128xf32, #tpu.memory_space<vmem>>, %arg4: memref<1x128xf32, #tpu.memory_space<vmem>>, %arg5: memref<1x128xf32, #tpu.memory_space<vmem>>) attributes {dimension_semantics = [], scalar_prefetch = 0 : i64, scratch_operands = 0 : i64, tpu.core_type = #tpu.core_type<tc>} {
    %c0 = arith.constant 0 : index
    %c0_0 = arith.constant 0 : index
    %0 = vector.load %arg0[%c0, %c0_0] : memref<4x32xf32, #tpu.memory_space<vmem>>, vector<4x32xf32>
    %c0_1 = arith.constant 0 : index
    %c0_2 = arith.constant 0 : index
    %1 = vector.load %arg1[%c0_1, %c0_2] : memref<32x256xf32, #tpu.memory_space<vmem>>, vector<32x256xf32>
    %cst = arith.constant dense<0.000000e+00> : vector<4x256xf32>
    %2 = tpu.matmul %0, %1, %cst {dimension_numbers = #tpu.dot_dimension_numbers<[1], [0], [0], [1], [0, 0, 1, 1], [], []>} : vector<4x32xf32>, vector<32x256xf32>, vector<4x256xf32> -> vector<4x256xf32>
    %c0_3 = arith.constant 0 : index
    %c0_4 = arith.constant 0 : index
    %3 = vector.load %arg2[%c0_3, %c0_4] : memref<1x256xf32, #tpu.memory_space<vmem>>, vector<1x256xf32>
    %4 = vector.broadcast %3 : vector<1x256xf32> to vector<4x256xf32>
    %5 = arith.addf %2, %4 : vector<4x256xf32>
    %cst_5 = arith.constant 0.000000e+00 : f32
    %6 = vector.broadcast %cst_5 : f32 to vector<4x256xf32>
    %7 = arith.maximumf %5, %6 : vector<4x256xf32>
    %8 = vector.extract_strided_slice %7 {offsets = [0, 0], sizes = [1, 64], strides = [1, 1]} : vector<4x256xf32> to vector<1x64xf32>
    %9 = vector.extract_strided_slice %7 {offsets = [1, 64], sizes = [1, 64], strides = [1, 1]} : vector<4x256xf32> to vector<1x64xf32>
    %10 = vector.extract_strided_slice %7 {offsets = [2, 128], sizes = [1, 64], strides = [1, 1]} : vector<4x256xf32> to vector<1x64xf32>
    %11 = vector.extract_strided_slice %7 {offsets = [3, 192], sizes = [1, 64], strides = [1, 1]} : vector<4x256xf32> to vector<1x64xf32>
    %12 = tpu.concatenate %8, %9, %10, %11 in 0 : vector<1x64xf32>, vector<1x64xf32>, vector<1x64xf32>, vector<1x64xf32> -> vector<4x64xf32>
    %c0_6 = arith.constant 0 : index
    %c0_7 = arith.constant 0 : index
    %13 = vector.load %arg3[%c0_6, %c0_7] : memref<64x128xf32, #tpu.memory_space<vmem>>, vector<64x128xf32>
    %cst_8 = arith.constant dense<0.000000e+00> : vector<4x128xf32>
    %14 = tpu.matmul %12, %13, %cst_8 {dimension_numbers = #tpu.dot_dimension_numbers<[1], [0], [0], [1], [0, 0, 1, 1], [], []>} : vector<4x64xf32>, vector<64x128xf32>, vector<4x128xf32> -> vector<4x128xf32>
    %c0_9 = arith.constant 0 : index
    %c0_10 = arith.constant 0 : index
    %15 = vector.load %arg4[%c0_9, %c0_10] : memref<1x128xf32, #tpu.memory_space<vmem>>, vector<1x128xf32>
    %16 = vector.broadcast %15 : vector<1x128xf32> to vector<4x128xf32>
    %17 = arith.addf %14, %16 : vector<4x128xf32>
    %18 = tpu.iota {dimensions = array<i32: 1>} : vector<4x128xi32>
    %19 = tpu.iota {dimensions = array<i32: 0>} : vector<4x128xi32>
    %c32_i32 = arith.constant 32 : i32
    %20 = vector.broadcast %c32_i32 : i32 to vector<4x128xi32>
    %21 = arith.muli %19, %20 : vector<4x128xi32>
    %22 = arith.cmpi sge, %18, %21 : vector<4x128xi32>
    %c32_i32_11 = arith.constant 32 : i32
    %23 = vector.broadcast %c32_i32_11 : i32 to vector<4x128xi32>
    %24 = arith.addi %21, %23 : vector<4x128xi32>
    %25 = arith.cmpi slt, %18, %24 : vector<4x128xi32>
    %26 = arith.andi %22, %25 : vector<4x128xi1>
    %cst_12 = arith.constant 0.000000e+00 : f32
    %27 = vector.broadcast %cst_12 : f32 to vector<4x128xf32>
    %28 = arith.select %26, %17, %27 : vector<4x128xi1>, vector<4x128xf32>
    %cst_13 = arith.constant dense<0.000000e+00> : vector<128xf32>
    %29 = vector.multi_reduction <add>, %28, %cst_13 [0] : vector<4x128xf32> to vector<128xf32>
    %30 = vector.shape_cast %29 : vector<128xf32> to vector<1x128xf32>
    %c0_14 = arith.constant 0 : index
    %c0_15 = arith.constant 0 : index
    %31 = vector.load %arg5[%c0_14, %c0_15] : memref<1x128xf32, #tpu.memory_space<vmem>>, vector<1x128xf32>
    tpu.vector_store %arg5[%c0_14, %c0_15], %30 {strides = array<i32>} : memref<1x128xf32, #tpu.memory_space<vmem>>, vector<1x128xf32>,
    return
  }
}

</mosaic_0001>

<llo_original>
// kernel: combined_model_forward.1
$region0: #{combined_model_forward.1}
  #allocation0 [shape = 'u32[]', space=smem, size = 0x4, offset = 0x4, fixed_abs, tag = 'smem constant byte address 0x4 - core index']
  #allocation1 [shape = 'u32[144,128]{1,0:T(1,128)}', space=vmem, size = 0x12000, scoped, tag = 'internal scratch']
  %s0 = inlined_call_operand.vmem [shape: f32[4,32], index: 0, kind: input, shape index: {}]
  %s1 = inlined_call_operand.vmem [shape: f32[32,256], index: 1, kind: input, shape index: {}]
  %s2 = inlined_call_operand.vmem [shape: f32[1,256], index: 2, kind: input, shape index: {}]
  %s3 = inlined_call_operand.vmem [shape: f32[64,128], index: 3, kind: input, shape index: {}]
  %s4 = inlined_call_operand.vmem [shape: f32[1,128], index: 4, kind: input, shape index: {}]
  %s5 = inlined_call_operand.hbm [shape: f32[1,128], index: 5, kind: output, shape index: {}]
  %s6 = sld [smem:[#allocation0]]
  $region30: #{combined_model_forward.1} parent=0
    _
  %s8 = ssub.s32 1, %s6
  %s9 = scalar_select 0, %s8, %s6
  $region1: #{combined_model_forward.1} parent=0
    #allocation2 [shape = 'u8[512]{0}', space=vmem, size = 0x400, scoped, tag = 'output window, operand 0, single buffered']
    #allocation3 [shape = 's32[1]{0}', space=sflag, size = 0x4, scoped, tag = 'scoped memory for combined_model_forward.1']
    %10 = vsyncpa [#allocation3], 0
    // Predicated region
    $region2: #{combined_model_forward.1} parent=1 // pred_check
      _
    $region3: #{combined_model_forward.1} parent=1 // pred_check_branch
      %12 = sbr.rel (0) target = $region5
    $region4: #{combined_model_forward.1} parent=1 // pred_region
      _
    $region5: #{combined_model_forward.1} parent=1 // pred_fallthru
      _
    // Predicated region
    $region6: #{combined_model_forward.1} parent=1 // pred_check
      _
    $region7: #{combined_model_forward.1} parent=1 // pred_check_branch
      %14 = sbr.rel (0) target = $region9
    $region8: #{combined_model_forward.1} parent=1 // pred_region
      _
    $region9: #{combined_model_forward.1} parent=1 // pred_fallthru
      _
    // Predicated region
    $region10: #{combined_model_forward.1} parent=1 // pred_check
      _
    $region11: #{combined_model_forward.1} parent=1 // pred_check_branch
      %16 = sbr.rel (0) target = $region13
    $region12: #{combined_model_forward.1} parent=1 // pred_region
      _
    $region13: #{combined_model_forward.1} parent=1 // pred_fallthru
      _
    // Predicated region
    $region14: #{combined_model_forward.1} parent=1 // pred_check
      _
    $region15: #{combined_model_forward.1} parent=1 // pred_check_branch
      %18 = sbr.rel (0) target = $region17
    $region16: #{combined_model_forward.1} parent=1 // pred_region
      _
    $region17: #{combined_model_forward.1} parent=1 // pred_fallthru
      _
    // Predicated region
    $region18: #{combined_model_forward.1} parent=1 // pred_check
      _
    $region19: #{combined_model_forward.1} parent=1 // pred_check_branch
      %20 = sbr.rel (0) target = $region21
    $region20: #{combined_model_forward.1} parent=1 // pred_region
      _
    $region21: #{combined_model_forward.1} parent=1 // pred_fallthru
      _
    %v21 = vld [vmem:[%s0] sm:$0xf]
    %v22 = vld [vmem:[%s1] sm:$0xff]
    %v23 = vld [vmem:[%s1 + $0x8] sm:$0xff]
    %v24 = vld [vmem:[%s1 + $0x10] sm:$0xff]
    %v25 = vld [vmem:[%s1 + $0x18] sm:$0xff]
    %v26 = vld [vmem:[%s1 + $0x20] sm:$0xff]
    %v27 = vld [vmem:[%s1 + $0x28] sm:$0xff]
    %v28 = vld [vmem:[%s1 + $0x30] sm:$0xff]
    %v29 = vld [vmem:[%s1 + $0x38] sm:$0xff]
    %v30 = vld [vmem:[%s2] sm:$0x3]
    %v32 = vlaneseq
    %v33 = vshrl.u32 %v32, 7
    %v34 = vsub.s32 0, %v33
    %v35 = vrot.slane %v30, %v34
    %v36 = vlaneseq
    %v37 = vshrl.u32 %v36, 7
    %v38 = vsub.s32 1, %v37
    %v39 = vrot.slane %v30, %v38
    %vm42 = vcmask 261120
    %v44 = vsel %vm42, %v21, 0
    %46 = vmatprep.subr.mxu0 %v23
    %47 = vmatpush1.msra.mxu0 %v22
    %48 = vmatprep.subr.mxu0 %v25
    %49 = vmatpush1.msra.mxu0 %v24
    %50 = vmatprep.subr.mxu0 %v27
    %51 = vmatpush1.msra.mxu0 %v26
    %52 = vmatprep.subr.mxu0 %v29
    %53 = vmatpush1.msra.mxu0 %v28
    %54 = vmatprep.subr.mxu0 0.0
    %55 = vmatpush1.msra.mxu0 0.0
    %56 = vmatprep.subr.mxu0 0.0
    %57 = vmatpush1.msra.mxu0 0.0
    %58 = vmatprep.subr.mxu0 0.0
    %59 = vmatpush1.msra.mxu0 0.0
    %60 = vmatprep.subr.mxu0 0.0
    %61 = vmatpush1.msra.mxu0 0.0
    %62 = vmatprep.subr.mxu0 0.0
    %63 = vmatpush1.msra.mxu0 0.0
    %64 = vmatprep.subr.mxu0 0.0
    %65 = vmatpush1.msra.mxu0 0.0
    %66 = vmatprep.subr.mxu0 0.0
    %67 = vmatpush1.msra.mxu0 0.0
    %68 = vmatprep.subr.mxu0 0.0
    %69 = vmatpush1.msra.mxu0 0.0
    %70 = vmatprep.subr.mxu0 0.0
    %71 = vmatpush1.msra.mxu0 0.0
    %72 = vmatprep.subr.mxu0 0.0
    %73 = vmatpush1.msra.mxu0 0.0
    %74 = vmatprep.subr.mxu0 0.0
    %75 = vmatpush1.msra.mxu0 0.0
    %76 = vmatprep.subr.mxu0 0.0
    %77 = vmatpush1.msra.mxu0 0.0
    %78 = vmatprep.subr.mxu0 0.0
    %79 = vmatpush1.msra.mxu0 0.0
    %80 = vmatprep.subr.mxu0 0.0
    %81 = vmatpush1.msra.mxu0 0.0
    %82 = vmatprep.subr.mxu0 0.0
    %83 = vmatpush1.msra.mxu0 0.0
    %84 = vmatprep.subr.mxu0 0.0
    %85 = vmatpush1.msra.mxu0 0.0
    %86 = vmatprep.subr.mxu0 0.0
    %87 = vmatpush1.msra.mxu0 0.0
    %88 = vmatprep.subr.mxu0 0.0
    %89 = vmatpush1.msra.mxu0 0.0
    %90 = vmatprep.subr.mxu0 0.0
    %91 = vmatpush1.msra.mxu0 0.0
    %92 = vmatprep.subr.mxu0 0.0
    %93 = vmatpush1.msra.mxu0 0.0
    %94 = vmatprep.subr.mxu0 0.0
    %95 = vmatpush1.msra.mxu0 0.0
    %96 = vmatprep.subr.mxu0 0.0
    %97 = vmatpush1.msra.mxu0 0.0
    %98 = vmatprep.subr.mxu0 0.0
    %99 = vmatpush1.msra.mxu0 0.0
    %100 = vmatprep.subr.mxu0 0.0
    %101 = vmatpush1.msra.mxu0 0.0
    %102 = vmatprep.subr.mxu0 0.0
    %103 = vmatpush1.msra.mxu0 0.0
    %104 = vmatprep.subr.mxu0 0.0
    %105 = vmatpush1.msra.mxu0 0.0
    %106 = vmatprep.subr.mxu0 0.0
    %107 = vmatpush1.msra.mxu0 0.0
    %108 = vmatprep.subr.mxu0 0.0
    %109 = vmatpush1.msra.mxu0 0.0
    %110 = vmatprep.mubr.f32.mxu0 0.0
    %111 = vmatmul.mubr.f32.gmra.mrb[0].mxu0 %v44
    %v112 = vpop.f32.mrb[0].mxu0
    %v113 = vadd.f32 %v35, %v112
    %v114 = vpop.f32.mrb[0].mxu0
    %v115 = vadd.f32 %v39, %v114
    %116 = vdwg.mxu0
    %v117 = vmax.f32 %v113, 0.0
    %v118 = vmax.f32 %v115, 0.0
    %120 = vrot.lane.b32.xlu0 %v117, 64
    %v121 = vpop.permute.xlu0 %120
    %124 = vrot.lane.b32.xlu0 %v118, 64
    %v125 = vpop.permute.xlu0 %124
    %vm127 = vcmask 1040384
    %v128 = vsel %vm127, %v117, %v121
    %vm129 = vcmask 1041408
    %v130 = vsel %vm129, %v128, %v118
    %vm131 = vcmask 1042432
    %v132 = vsel %vm131, %v130, %v125
    %v133 = vld [vmem:[%s3] sm:$0xff]
    %v134 = vld [vmem:[%s3 + $0x8] sm:$0xff]
    %v135 = vld [vmem:[%s3 + $0x10] sm:$0xff]
    %v136 = vld [vmem:[%s3 + $0x18] sm:$0xff]
    %v137 = vld [vmem:[%s3 + $0x20] sm:$0xff]
    %v138 = vld [vmem:[%s3 + $0x28] sm:$0xff]
    %v139 = vld [vmem:[%s3 + $0x30] sm:$0xff]
    %v140 = vld [vmem:[%s3 + $0x38] sm:$0xff]
    %v141 = vld [vmem:[%s4] sm:$0x1]
    %v143 = vlaneseq
    %v144 = vshrl.u32 %v143, 7
    %v145 = vsub.s32 0, %v144
    %v146 = vrot.slane %v141, %v145
    %vm148 = vcmask 523264
    %v150 = vsel %vm148, %v132, 0
    %152 = vmatprep.subr.mxu0 0.0
    %153 = vmatpush1.msra.mxu0 %v133
    %154 = vmatprep.subr.mxu0 0.0
    %155 = vmatpush1.msra.mxu0 %v134
    %156 = vmatprep.subr.mxu0 0.0
    %157 = vmatpush1.msra.mxu0 %v135
    %158 = vmatprep.subr.mxu0 0.0
    %159 = vmatpush1.msra.mxu0 %v136
    %160 = vmatprep.subr.mxu0 0.0
    %161 = vmatpush1.msra.mxu0 %v137
    %162 = vmatprep.subr.mxu0 0.0
    %163 = vmatpush1.msra.mxu0 %v138
    %164 = vmatprep.subr.mxu0 0.0
    %165 = vmatpush1.msra.mxu0 %v139
    %166 = vmatprep.subr.mxu0 0.0
    %167 = vmatpush1.msra.mxu0 %v140
    %168 = vmatprep.subr.mxu0 0.0
    %169 = vmatpush1.msra.mxu0 0.0
    %170 = vmatprep.subr.mxu0 0.0
    %171 = vmatpush1.msra.mxu0 0.0
    %172 = vmatprep.subr.mxu0 0.0
    %173 = vmatpush1.msra.mxu0 0.0
    %174 = vmatprep.subr.mxu0 0.0
    %175 = vmatpush1.msra.mxu0 0.0
    %176 = vmatprep.subr.mxu0 0.0
    %177 = vmatpush1.msra.mxu0 0.0
    %178 = vmatprep.subr.mxu0 0.0
    %179 = vmatpush1.msra.mxu0 0.0
    %180 = vmatprep.subr.mxu0 0.0
    %181 = vmatpush1.msra.mxu0 0.0
    %182 = vmatprep.subr.mxu0 0.0
    %183 = vmatpush1.msra.mxu0 0.0
    %184 = vmatprep.subr.mxu0 0.0
    %185 = vmatpush1.msra.mxu0 0.0
    %186 = vmatprep.subr.mxu0 0.0
    %187 = vmatpush1.msra.mxu0 0.0
    %188 = vmatprep.subr.mxu0 0.0
    %189 = vmatpush1.msra.mxu0 0.0
    %190 = vmatprep.subr.mxu0 0.0
    %191 = vmatpush1.msra.mxu0 0.0
    %192 = vmatprep.subr.mxu0 0.0
    %193 = vmatpush1.msra.mxu0 0.0
    %194 = vmatprep.subr.mxu0 0.0
    %195 = vmatpush1.msra.mxu0 0.0
    %196 = vmatprep.subr.mxu0 0.0
    %197 = vmatpush1.msra.mxu0 0.0
    %198 = vmatprep.subr.mxu0 0.0
    %199 = vmatpush1.msra.mxu0 0.0
    %200 = vmatprep.subr.mxu0 0.0
    %201 = vmatpush1.msra.mxu0 0.0
    %202 = vmatprep.subr.mxu0 0.0
    %203 = vmatpush1.msra.mxu0 0.0
    %204 = vmatprep.subr.mxu0 0.0
    %205 = vmatpush1.msra.mxu0 0.0
    %206 = vmatprep.subr.mxu0 0.0
    %207 = vmatpush1.msra.mxu0 0.0
    %208 = vmatprep.subr.mxu0 0.0
    %209 = vmatpush1.msra.mxu0 0.0
    %210 = vmatprep.subr.mxu0 0.0
    %211 = vmatpush1.msra.mxu0 0.0
    %212 = vmatprep.subr.mxu0 0.0
    %213 = vmatpush1.msra.mxu0 0.0
    %214 = vmatprep.subr.mxu0 0.0
    %215 = vmatpush1.msra.mxu0 0.0
    %216 = vmatprep.mubr.f32.mxu0 0.0
    %217 = vmatmul.mubr.f32.gmra.mrb[0].mxu0 %v150
    %v218 = vpop.f32.mrb[0].mxu0
    %v219 = vadd.f32 %v146, %v218
    %v220 = vpop.f32.mrb[0].mxu0
    %221 = vdwg.mxu0
    %v222 = vlaneseq
    %v223 = vand.u32 %v222, 127
    %v224 = vlaneseq
    %v225 = vshrl.u32 %v224, 7
    %v226 = vmul.u32 %v225, 32
    %vm227 = vcmp.ge.s32.totalorder %v223, %v226
    %v228 = vadd.s32 %v226, 32
    %vm229 = vcmp.lt.s32.totalorder %v223, %v228
    %vm230 = vmand %vm227, %vm229
    %v231 = vsel %vm230, %v219, 0.0
    %vm232 = vcmask 1043456
    %v233 = vsel %vm232, %v231, 0.0
    %v234 = vrot.slane %v233, 4
    %v235 = vadd.f32 %v233, %v234
    %v236 = vrot.slane %v235, 2
    %v237 = vadd.f32 %v235, %v236
    %v238 = vrot.slane %v237, 1
    %v239 = vadd.f32 %v237, %v238
    %240 = vst [vmem:[#allocation2] sm:$0x1] %v239
    // Predicated region
    $region22: #{combined_model_forward.1} parent=1 // pred_check
      _
    $region23: #{combined_model_forward.1} parent=1 // pred_check_branch
      %242 = sbr.rel (0) target = $region25
    $region24: #{combined_model_forward.1} parent=1 // pred_region
      %s244 = ssub.s32 16, 16
      %245 = vsyncadd [#allocation3], %s244
      %s247 = sshll.u32 [#allocation2], 4
      %s248 = int_to_ptr.vmem [resolvable:$true] %s247
      %250 = dma.vmem_to_hbm [thread:$0]  %s248, 16, %s5, [#allocation3]
    $region25: #{combined_model_forward.1} parent=1 // pred_fallthru
      _
    // Predicated region
    $region26: #{combined_model_forward.1} parent=1 // pred_check
      _
    $region27: #{combined_model_forward.1} parent=1 // pred_check_branch
      %252 = sbr.rel (0) target = $region29
    $region28: #{combined_model_forward.1} parent=1 // pred_region
      %253 = dma.done [#allocation3], 16
    $region29: #{combined_model_forward.1} parent=1 // pred_fallthru
      _
    %254 = vsyncpa [#allocation3], 1

</llo_original>
